<compile_context>
chip_gen: v7x
topology: tpu7x:2x2x1
jax: 0.10.0
libtpu: 0.0.40
codegen_flags: <defaults>
</compile_context>

<pallas_src>
import jax
import jax.numpy as jnp
from jax.experimental import pallas as pl
from jax.experimental.pallas import tpu as pltpu


# ----------------------------- kernels -------------------------------------


def _make_vpu_kernel(Cr, mix_dtype):
    """Unrolled VPU/XLU channel-mix kernel for small Cr*C."""

    def kernel(w1_ref, b1_ref, w2_ref, b2_ref, x_ref, o_ref):
        # w1_ref: (Cr, C, 1) f32 VMEM (channel axis on sublanes -> broadcast)
        # b1_ref: (Cr,), w2_ref: (Cr,), b2_ref: (1,)  -- f32 SMEM scalar tables
        # x_ref / o_ref: (TB, C, TN)
        x = x_ref[...]
        xm = x.astype(mix_dtype)

        logits = None
        for cr in range(Cr):
            w_col = w1_ref[cr].astype(mix_dtype)                    # (C, 1)
            # channel reduction on the sublane axis (XLU), keepdims -> (TB,1,TN)
            s = jnp.sum(xm * w_col[None, :, :], axis=1, keepdims=True)
            h = jnp.maximum(s.astype(jnp.float32) + b1_ref[cr], 0.0)
            t = w2_ref[cr] * h
            logits = t if logits is None else logits + t

        attn = jax.nn.sigmoid(logits + b2_ref[0])                   # (TB,1,TN) f32
        # attention broadcast over channel sublanes; one dense full-block store
        o_ref[...] = x * attn.astype(x.dtype)

    return kernel


def _make_mxu_kernel(tb):
    """MXU channel-mix kernel for larger Cr*C (not hit at the demo shape)."""

    def kernel(w1_ref, b1_ref, w2_ref, b2_ref, x_ref, o_ref):
        # w1_ref: (Cr, C), b1_ref: (Cr, 1), w2_ref: (1, Cr) -- f32 VMEM
        # b2_ref: (1,) f32 SMEM;  x_ref / o_ref: (TB, C, TN)
        x = x_ref[...]
        for b in range(tb):
            xb = x[b].astype(jnp.float32)                           # (C, TN)
            h = jnp.dot(w1_ref[...], xb, preferred_element_type=jnp.float32)
            h = jnp.maximum(h + b1_ref[...], 0.0)                   # (Cr, TN)
            logit = jnp.dot(w2_ref[...], h, preferred_element_type=jnp.float32)
            attn = jax.nn.sigmoid(logit + b2_ref[0])                # (1, TN)
            o_ref[b] = x[b] * attn.astype(x.dtype)

    return kernel


# --------------------------- tile selection ---------------------------------


def _round_up(v, m):
    return ((v + m - 1) // m) * m


def _sublane_pack(itemsize):
    # second-minor dim pads to 8 rows for 4-byte, 16 for 2-byte, 32 for 1-byte
    return max(8, 32 // itemsize)


def _pick_tiles(B, N, C, itemsize, budget_bytes, min_steps):
    """Pick (tb, tn) with PADDED-channel VMEM accounting and >= min_steps grid."""
    padded_c = _round_up(C, _sublane_pack(itemsize))

    def block_bytes(tb_, tn_):
        return tb_ * padded_c * tn_ * itemsize

    # largest multiple-of-128 divisor of N whose padded (1, C, tn) block fits
    tn = 128
    t = 128
    while t <= N:
        if N % t == 0 and block_bytes(1, t) <= budget_bytes:
            tn = t
        t += 128

    # fold batch elements while the padded block still fits the budget
    tb = 1
    while tb < B and B % (2 * tb) == 0 and block_bytes(2 * tb, tn) <= budget_bytes:
        tb *= 2

    # keep enough grid steps to feed both TensorCores on v7x (and the pipeline)
    def steps(tb_, tn_):
        return (B // tb_) * (N // tn_)

    while steps(tb, tn) < min_steps:
        if tb > 1:
            tb //= 2
        else:
            t = tn - 128
            while t >= 128 and N % t != 0:
                t -= 128
            if t < 128:
                break
            tn = t

    return tb, tn, padded_c


# ------------------------------ wrapper --------------------------------------


def spatial_attention(x, w1, b1, w2, b2, H, W, *,
                      block_budget_bytes=2 * 1024 * 1024,
                      min_grid_steps=4,
                      mxu_threshold=64):
    """x: (B, C, H, W). w1: (Cr, C), b1: (Cr,), w2: (1, Cr), b2: (1,)."""
    B, C, H_, W_ = x.shape
    assert (H_, W_) == (H, W)
    Cr = w1.shape[0]
    assert Cr >= 1 and w1.shape == (Cr, C) and w2.shape == (1, Cr)
    assert b1.shape == (Cr,) and b2.shape == (1,)

    N = H * W
    Np = _round_up(N, 128)
    x_flat = x.reshape(B, C, N)
    if Np != N:
        # lane-dense padding; padded columns are zero -> zero outputs, sliced off
        x_flat = jnp.pad(x_flat, ((0, 0), (0, 0), (0, Np - N)))

    itemsize = jnp.dtype(x.dtype).itemsize
    tb, tn, padded_c = _pick_tiles(B, Np, C, itemsize,
                                   block_budget_bytes, min_grid_steps)

    use_mxu = (Cr * C) > mxu_threshold
    if use_mxu:
        tb = 1  # keep the in-block batch loop trivial; blocks are large anyway

    # f32 parameter tables
    w1f = w1.astype(jnp.float32)
    b1f = b1.astype(jnp.float32).reshape(Cr)
    w2f = w2.astype(jnp.float32)
    b2f = b2.astype(jnp.float32).reshape(1)

    smem = pl.BlockSpec(memory_space=pltpu.MemorySpace.SMEM)
    x_spec = pl.BlockSpec((tb, C, tn), lambda b, n: (b, 0, n))
    out_spec = pl.BlockSpec((tb, C, tn), lambda b, n: (b, 0, n))

    if use_mxu:
        kernel = _make_mxu_kernel(tb)
        w_args = (w1f, b1f.reshape(Cr, 1), w2f, b2f)
        w_specs = [
            pl.BlockSpec((Cr, C), lambda b, n: (0, 0)),
            pl.BlockSpec((Cr, 1), lambda b, n: (0, 0)),
            pl.BlockSpec((1, Cr), lambda b, n: (0, 0)),
            smem,
        ]
    else:
        mix_dtype = x.dtype if x.dtype == jnp.bfloat16 else jnp.float32
        kernel = _make_vpu_kernel(Cr, mix_dtype)
        w_args = (w1f.reshape(Cr, C, 1), b1f, w2f.reshape(Cr), b2f)
        w_specs = [
            pl.BlockSpec((Cr, C, 1), lambda b, n: (0, 0, 0)),
            smem, smem, smem,
        ]

    # Explicit VMEM limit consistent with the PADDED block accounting:
    # 2x double-buffered in + out blocks, ~3 block-sized f32 temporaries,
    # plus weights/slack.  Clamped to a range safe on v5e/v6e/v7x.
    block_elems = tb * padded_c * tn
    vmem_need = 4 * block_elems * itemsize + 3 * block_elems * 4 + (2 << 20)
    vmem_limit = int(min(max(vmem_need, 16 << 20), 32 << 20))

    cost = pl.CostEstimate(
        flops=B * N * (2 * Cr * C + 2 * Cr + C),
        transcendentals=B * N,
        bytes_accessed=2 * B * C * N * itemsize,
    )

    out_flat = pl.pallas_call(
        kernel,
        out_shape=jax.ShapeDtypeStruct((B, C, Np), x.dtype),
        grid_spec=pltpu.PrefetchScalarGridSpec(
            num_scalar_prefetch=0,
            grid=(B // tb, Np // tn),
            in_specs=[*w_specs, x_spec],
            out_specs=out_spec,
        ),
        compiler_params=pltpu.CompilerParams(
            dimension_semantics=("parallel", "parallel"),
            vmem_limit_bytes=vmem_limit),
        cost_estimate=cost,
    )(*w_args, x_flat)

    if Np != N:
        out_flat = out_flat[:, :, :N]
    return out_flat.reshape(B, C, H, W)


# ------------------------------ reference ------------------------------------


def _reference(x, w1, b1, w2, b2):
    B, C, H, W = x.shape
    xf = x.reshape(B, C, H * W).astype(jnp.float32)
    h = jnp.maximum(jnp.einsum("oc,bcn->bon", w1, xf) + b1[None, :, None], 0.0)
    a = jax.nn.sigmoid(jnp.einsum("po,bon->bpn", w2, h) + b2[None, :, None])
    return (xf * a).astype(x.dtype).reshape(B, C, H, W)


if __name__ == "__main__":
    # Module config: H=16, W=16, in_channels=4, red_ratio=2 -> out_channels=2
    B, C, H, W = 2, 4, 16, 16
    red_ratio = 2
    Cr = C // red_ratio

    key = jax.random.PRNGKey(0)
    k_x, k_w1, k_b1, k_w2, k_b2 = jax.random.split(key, 5)

    x = jax.random.normal(k_x, (B, C, H, W), dtype=jnp.float32)

    # Conv1d kernel_size=1 weights squeezed to 2-D.
    w1 = 0.1 * jax.random.normal(k_w1, (Cr, C), dtype=jnp.float32)  # conv1.weight
    b1 = 0.1 * jax.random.normal(k_b1, (Cr,), dtype=jnp.float32)    # conv1.bias
    w2 = 0.1 * jax.random.normal(k_w2, (1, Cr), dtype=jnp.float32)  # conv2.weight
    b2 = 0.1 * jax.random.normal(k_b2, (1,), dtype=jnp.float32)     # conv2.bias

    out = spatial_attention(x, w1, b1, w2, b2, H, W)
    out = jax.block_until_ready(out)

    ref = _reference(x, w1, b1, w2, b2)
    assert out.shape == (B, C, H, W)
    assert jnp.allclose(out, ref, atol=1e-5, rtol=1e-5), "mismatch vs JAX reference"

    print("KERNEL_OK")
</pallas_src>

<mosaic_0001>
module attributes {stable_mosaic.version = 11 : i64} {
  func.func @kernel(%arg0: i32, %arg1: i32, %arg2: memref<2x4x1xf32, #tpu.memory_space<vmem>>, %arg3: memref<2xf32, #tpu.memory_space<smem>>, %arg4: memref<2xf32, #tpu.memory_space<smem>>, %arg5: memref<1xf32, #tpu.memory_space<smem>>, %arg6: memref<1x4x128xf32, #tpu.memory_space<vmem>>, %arg7: memref<1x4x128xf32, #tpu.memory_space<vmem>>) attributes {dimension_semantics = [#tpu.dimension_semantics<parallel>, #tpu.dimension_semantics<parallel>], iteration_bounds = array<i64: 2, 2>, scalar_prefetch = 0 : i64, scratch_operands = 0 : i64, tpu.core_type = #tpu.core_type<tc>, window_params = [{pipeline_mode = #tpu.pipeline_mode<synchronous>, transform_indices = @transform_0, window_bounds = array<i64: 2, 4, 1>}, {transform_indices = @transform_1, window_bounds = array<i64: 2>}, {transform_indices = @transform_2, window_bounds = array<i64: 2>}, {transform_indices = @transform_3, window_bounds = array<i64: 1>}, {transform_indices = @transform_4, window_bounds = array<i64: 1, 4, 128>}, {transform_indices = @transform_5, window_bounds = array<i64: 1, 4, 128>}]} {
    %c0 = arith.constant 0 : index
    %c0_0 = arith.constant 0 : index
    %c0_1 = arith.constant 0 : index
    %0 = vector.load %arg6[%c0, %c0_0, %c0_1] : memref<1x4x128xf32, #tpu.memory_space<vmem>>, vector<1x4x128xf32>
    %c0_2 = arith.constant 0 : index
    %c0_3 = arith.constant 0 : index
    %c0_4 = arith.constant 0 : index
    %1 = vector.load %arg2[%c0_2, %c0_3, %c0_4] : memref<2x4x1xf32, #tpu.memory_space<vmem>>, vector<1x4x1xf32>
    %2 = vector.shape_cast %1 : vector<1x4x1xf32> to vector<4x1xf32>
    %3 = vector.shape_cast %2 : vector<4x1xf32> to vector<1x4x1xf32>
    %4 = vector.broadcast %3 : vector<1x4x1xf32> to vector<1x4x128xf32>
    %5 = arith.mulf %0, %4 : vector<1x4x128xf32>
    %cst = arith.constant dense<0.000000e+00> : vector<1x128xf32>
    %6 = vector.multi_reduction <add>, %5, %cst [1] : vector<1x4x128xf32> to vector<1x128xf32>
    %7 = vector.shape_cast %6 : vector<1x128xf32> to vector<1x1x128xf32>
    %c0_5 = arith.constant 0 : index
    %8 = memref.load %arg3[%c0_5] : memref<2xf32, #tpu.memory_space<smem>>
    %9 = vector.broadcast %8 : f32 to vector<1x1x128xf32>
    %10 = arith.addf %7, %9 : vector<1x1x128xf32>
    %cst_6 = arith.constant 0.000000e+00 : f32
    %11 = vector.broadcast %cst_6 : f32 to vector<1x1x128xf32>
    %12 = arith.maximumf %10, %11 : vector<1x1x128xf32>
    %c0_7 = arith.constant 0 : index
    %13 = memref.load %arg4[%c0_7] : memref<2xf32, #tpu.memory_space<smem>>
    %14 = vector.broadcast %13 : f32 to vector<1x1x128xf32>
    %15 = arith.mulf %14, %12 : vector<1x1x128xf32>
    %c1 = arith.constant 1 : index
    %c0_8 = arith.constant 0 : index
    %c0_9 = arith.constant 0 : index
    %16 = vector.load %arg2[%c1, %c0_8, %c0_9] : memref<2x4x1xf32, #tpu.memory_space<vmem>>, vector<1x4x1xf32>
    %17 = vector.shape_cast %16 : vector<1x4x1xf32> to vector<4x1xf32>
    %18 = vector.shape_cast %17 : vector<4x1xf32> to vector<1x4x1xf32>
    %19 = vector.broadcast %18 : vector<1x4x1xf32> to vector<1x4x128xf32>
    %20 = arith.mulf %0, %19 : vector<1x4x128xf32>
    %cst_10 = arith.constant dense<0.000000e+00> : vector<1x128xf32>
    %21 = vector.multi_reduction <add>, %20, %cst_10 [1] : vector<1x4x128xf32> to vector<1x128xf32>
    %22 = vector.shape_cast %21 : vector<1x128xf32> to vector<1x1x128xf32>
    %c1_11 = arith.constant 1 : index
    %23 = memref.load %arg3[%c1_11] : memref<2xf32, #tpu.memory_space<smem>>
    %24 = vector.broadcast %23 : f32 to vector<1x1x128xf32>
    %25 = arith.addf %22, %24 : vector<1x1x128xf32>
    %cst_12 = arith.constant 0.000000e+00 : f32
    %26 = vector.broadcast %cst_12 : f32 to vector<1x1x128xf32>
    %27 = arith.maximumf %25, %26 : vector<1x1x128xf32>
    %c1_13 = arith.constant 1 : index
    %28 = memref.load %arg4[%c1_13] : memref<2xf32, #tpu.memory_space<smem>>
    %29 = vector.broadcast %28 : f32 to vector<1x1x128xf32>
    %30 = arith.mulf %29, %27 : vector<1x1x128xf32>
    %31 = arith.addf %15, %30 : vector<1x1x128xf32>
    %c0_14 = arith.constant 0 : index
    %32 = memref.load %arg5[%c0_14] : memref<1xf32, #tpu.memory_space<smem>>
    %33 = vector.broadcast %32 : f32 to vector<1x1x128xf32>
    %34 = arith.addf %31, %33 : vector<1x1x128xf32>
    %35 = arith.negf %34 : vector<1x1x128xf32>
    %36 = math.exp %35 : vector<1x1x128xf32>
    %cst_15 = arith.constant 1.000000e+00 : f32
    %37 = vector.broadcast %cst_15 : f32 to vector<1x1x128xf32>
    %38 = arith.addf %37, %36 : vector<1x1x128xf32>
    %39 = arith.divf %37, %38 : vector<1x1x128xf32>
    %40 = vector.broadcast %39 : vector<1x1x128xf32> to vector<1x4x128xf32>
    %41 = arith.mulf %0, %40 : vector<1x4x128xf32>
    %c0_16 = arith.constant 0 : index
    %c0_17 = arith.constant 0 : index
    %c0_18 = arith.constant 0 : index
    %42 = vector.load %arg7[%c0_16, %c0_17, %c0_18] : memref<1x4x128xf32, #tpu.memory_space<vmem>>, vector<1x4x128xf32>
    tpu.vector_store %arg7[%c0_16, %c0_17, %c0_18], %41 {strides = array<i32>} : memref<1x4x128xf32, #tpu.memory_space<vmem>>, vector<1x4x128xf32>,
    return
  }
  func.func @transform_0(%arg0: i32, %arg1: i32) -> (i32, i32, i32) {
    %c0_i32 = arith.constant 0 : i32
    %c0_i32_0 = arith.constant 0 : i32
    %c0_i32_1 = arith.constant 0 : i32
    %c0_i32_2 = arith.constant 0 : i32
    return %c0_i32, %c0_i32_0, %c0_i32_1 : i32, i32, i32
  }
  func.func @transform_1(%arg0: i32, %arg1: i32) -> i32 {
    %c0_i32 = arith.constant 0 : i32
    %c0_i32_0 = arith.constant 0 : i32
    return %c0_i32 : i32
  }
  func.func @transform_2(%arg0: i32, %arg1: i32) -> i32 {
    %c0_i32 = arith.constant 0 : i32
    %c0_i32_0 = arith.constant 0 : i32
    return %c0_i32 : i32
  }
  func.func @transform_3(%arg0: i32, %arg1: i32) -> i32 {
    %c0_i32 = arith.constant 0 : i32
    %c0_i32_0 = arith.constant 0 : i32
    return %c0_i32 : i32
  }
  func.func @transform_4(%arg0: i32, %arg1: i32) -> (i32, i32, i32) {
    %c0_i32 = arith.constant 0 : i32
    %c0_i32_0 = arith.constant 0 : i32
    return %arg0, %c0_i32, %arg1 : i32, i32, i32
  }
  func.func @transform_5(%arg0: i32, %arg1: i32) -> (i32, i32, i32) {
    %c0_i32 = arith.constant 0 : i32
    %c0_i32_0 = arith.constant 0 : i32
    return %arg0, %c0_i32, %arg1 : i32, i32, i32
  }
}

</mosaic_0001>

<llo_original>
// kernel: tpu_custom_call.1
$region0: #{tpu_custom_call.1}
  #allocation0 [shape = 'u32[]', space=smem, size = 0x4, offset = 0x4, fixed_abs, tag = 'smem constant byte address 0x4 - core index']
  #allocation1 [shape = 'u32[144,128]{1,0:T(1,128)}', space=vmem, size = 0x12000, scoped, tag = 'internal scratch']
  #allocation2 [shape = 'f32[1]{0:T(128)S(6)}', space=smem, size = 0x200, scoped, tag = 'scoped memory for tpu_custom_call.1']
  %s0 = inlined_call_operand.vmem [shape: f32[2,4,1], index: 0, kind: input, shape index: {}]
  %s1 = inlined_call_operand.vmem [shape: f32[2], index: 1, kind: input, shape index: {}]
  %s2 = inlined_call_operand.vmem [shape: f32[2], index: 2, kind: input, shape index: {}]
  %s3 = inlined_call_operand.<no memory space> [shape: f32[1], index: 3, kind: input, shape index: {}]
  %s4 = inlined_call_operand.vmem [shape: f32[2,4,256], index: 4, kind: input, shape index: {}]
  %s5 = inlined_call_operand.hbm [shape: f32[2,4,256], index: 5, kind: output, shape index: {}]
  %s6 = sld [smem:[#allocation0]]
  $region61: #{tpu_custom_call.1} parent=0
    _
  %s8 = ssub.s32 1, %s6
  %s9 = scalar_select 0, %s8, %s6
  %10 = sst [smem:[#allocation2]] %s3
  $region1: #{tpu_custom_call.1} parent=0
    #allocation3 [shape = 'u8[512]{0}', space=smem, size = 0x200, scoped, tag = 'input window, operand 1, single buffered']
    #allocation4 [shape = 's32[2]{0}', space=sflag, size = 0x8, scoped, tag = 'scoped memory for tpu_custom_call.1']
    #allocation5 [shape = 's32[2]{0}', space=sflag, size = 0x8, scoped, tag = 'scoped memory for tpu_custom_call.1']
    #allocation6 [shape = 'u8[512]{0}', space=smem, size = 0x200, scoped, tag = 'input window, operand 2, single buffered']
    #allocation7 [shape = 's32[1]{0}', space=sflag, size = 0x4, scoped, tag = 'scoped memory for tpu_custom_call.1']
    #allocation8 [shape = 'u8[4096]{0}', space=vmem, size = 0x1000, scoped, tag = 'output window, operand 0']
    %11 = vsyncpa [#allocation5], 0
    %12 = vsyncpa [#allocation7], 0
    %13 = vsyncpa [#allocation4], 0
    %s14 = scalar_lea.sflag [#allocation4], 1
    %15 = vsyncpa %s14, 0
    loop: start=0, step=1, limit=6
    $region2: #{tpu_custom_call.1} parent=1 // loop_pre_header
      _
    $region3: #{tpu_custom_call.1} parent=1 // loop_header
      %s17 = sphi 0, %s21
      %p18 = scmp.ge.s32.totalorder %s17, 6
      %s24 = sphi 0, %s36
      %s25 = sphi 0, %s32
      %s26 = sphi 0, %s24
      %s27 = sphi 0, %s25
      %s28 = sphi 0, %s26
      %s29 = sphi 0, %s27
      %s37 = sphi 0, %s37
      %s39 = sphi 0, %s37
      %s40 = sphi 0, %s39
      %s54 = sphi 0, %s40
      %s58 = sphi 0, %s58
      %s60 = sphi 0, %s58
      %s61 = sphi 0, %s60
      %s75 = sphi 0, %s61
      %s79 = sphi 0, %s79
      %s81 = sphi 0, %s79
      %s82 = sphi 0, %s81
      %s96 = sphi 0, %s82
      %s100 = sphi 0, %s100
      %s102 = sphi 0, %s100
      %s103 = sphi 0, %s102
      %s117 = sphi 0, %s103
      %s125 = sphi 0, %s127
      %s128 = sphi 0, %s125
      %s129 = sphi 0, %s128
      %s145 = sphi 0, %s129
      %s153 = sphi 0, %s155
      %s156 = sphi 0, %s153
      %s157 = sphi 0, %s156
      %s173 = sphi 0, %s157
    $region4: #{tpu_custom_call.1} parent=1 // loop_header_branch
      %20 = sbr.rel (%p18) target = $region8
    $region5: #{tpu_custom_call.1} parent=1 // loop_body
      %s22 = ssub.s32 %s17, 1
      %s23 = ssub.s32 %s17, 2
      %s30 = sadd.s32 1, %s25
      %p31 = scmp.ge.s32.totalorder %s30, 2
      %s32 = scalar_select %p31, 0, %s30
      %s33 = sadd.s32 1, %s24
      %s34 = scalar_select %p31, %s33, %s24
      %p35 = scmp.ge.s32.totalorder %s34, 2
      %s36 = scalar_select %p35, 0, %s34
      %s38 = sadd.s32 %s37, 1
      %p41 = scmp.eq.s32.totalorder %s17, 3
      %p42 = scmp.ne.s32.totalorder %s37, %s39
      %p43 = scmp.eq.s32.totalorder %s17, 0
      %p44 = por %p42, %p43
      %p45 = scmp.ne.s32.totalorder %s37, %s39
      %p46 = scmp.eq.s32.totalorder %s22, 3
      %p47 = por %p45, %p46
      %p48 = scmp.ne.s32.totalorder %s39, %s40
      %p49 = scmp.eq.s32.totalorder %s22, 0
      %p50 = por %p48, %p49
      %p51 = scmp.ne.s32.totalorder %s39, %s40
      %p52 = scmp.eq.s32.totalorder %s23, 3
      %p53 = por %p51, %p52
      %p55 = scmp.ne.s32.totalorder %s40, %s54
      %p56 = scmp.eq.s32.totalorder %s23, 0
      %p57 = por %p55, %p56
      %s59 = sadd.s32 %s58, 1
      %p62 = scmp.eq.s32.totalorder %s17, 3
      %p63 = scmp.ne.s32.totalorder %s58, %s60
      %p64 = scmp.eq.s32.totalorder %s17, 0
      %p65 = por %p63, %p64
      %p66 = scmp.ne.s32.totalorder %s58, %s60
      %p67 = scmp.eq.s32.totalorder %s22, 3
      %p68 = por %p66, %p67
      %p69 = scmp.ne.s32.totalorder %s60, %s61
      %p70 = scmp.eq.s32.totalorder %s22, 0
      %p71 = por %p69, %p70
      %p72 = scmp.ne.s32.totalorder %s60, %s61
      %p73 = scmp.eq.s32.totalorder %s23, 3
      %p74 = por %p72, %p73
      %p76 = scmp.ne.s32.totalorder %s61, %s75
      %p77 = scmp.eq.s32.totalorder %s23, 0
      %p78 = por %p76, %p77
      %s80 = sadd.s32 %s79, 1
      %p83 = scmp.eq.s32.totalorder %s17, 3
      %p84 = scmp.ne.s32.totalorder %s79, %s81
      %p85 = scmp.eq.s32.totalorder %s17, 0
      %p86 = por %p84, %p85
      %p87 = scmp.ne.s32.totalorder %s79, %s81
      %p88 = scmp.eq.s32.totalorder %s22, 3
      %p89 = por %p87, %p88
      %p90 = scmp.ne.s32.totalorder %s81, %s82
      %p91 = scmp.eq.s32.totalorder %s22, 0
      %p92 = por %p90, %p91
      %p93 = scmp.ne.s32.totalorder %s81, %s82
      %p94 = scmp.eq.s32.totalorder %s23, 3
      %p95 = por %p93, %p94
      %p97 = scmp.ne.s32.totalorder %s82, %s96
      %p98 = scmp.eq.s32.totalorder %s23, 0
      %p99 = por %p97, %p98
      %s101 = sadd.s32 %s100, 1
      %p104 = scmp.eq.s32.totalorder %s17, 3
      %p105 = scmp.ne.s32.totalorder %s100, %s102
      %p106 = scmp.eq.s32.totalorder %s17, 0
      %p107 = por %p105, %p106
      %p108 = scmp.ne.s32.totalorder %s100, %s102
      %p109 = scmp.eq.s32.totalorder %s22, 3
      %p110 = por %p108, %p109
      %p111 = scmp.ne.s32.totalorder %s102, %s103
      %p112 = scmp.eq.s32.totalorder %s22, 0
      %p113 = por %p111, %p112
      %p114 = scmp.ne.s32.totalorder %s102, %s103
      %p115 = scmp.eq.s32.totalorder %s23, 3
      %p116 = por %p114, %p115
      %p118 = scmp.ne.s32.totalorder %s103, %s117
      %p119 = scmp.eq.s32.totalorder %s23, 0
      %p120 = por %p118, %p119
      %s121 = ssub.s32 %s24, %s36
      %s122 = ssub.s32 %s25, %s32
      %s123 = sor.u32 %s121, %s122
      %p124 = scmp.eq.s32.totalorder %s123, 0
      %s126 = sadd.s32 %s125, 1
      %s127 = scalar_select %p124, %s125, %s126
      %p130 = pneg %p124
      %p131 = scmp.eq.s32.totalorder %s17, 3
      %p132 = por %p130, %p131
      %p133 = scmp.ne.s32.totalorder %s125, %s128
      %p134 = scmp.eq.s32.totalorder %s17, 0
      %p135 = por %p133, %p134
      %p136 = scmp.ne.s32.totalorder %s125, %s128
      %p137 = scmp.eq.s32.totalorder %s22, 3
      %p138 = por %p136, %p137
      %p139 = scmp.ne.s32.totalorder %s128, %s129
      %p140 = scmp.eq.s32.totalorder %s22, 0
      %p141 = por %p139, %p140
      %p142 = scmp.ne.s32.totalorder %s128, %s129
      %p143 = scmp.eq.s32.totalorder %s23, 3
      %p144 = por %p142, %p143
      %p146 = scmp.ne.s32.totalorder %s129, %s145
      %p147 = scmp.eq.s32.totalorder %s23, 0
      %p148 = por %p146, %p147
      %s149 = ssub.s32 %s24, %s36
      %s150 = ssub.s32 %s25, %s32
      %s151 = sor.u32 %s149, %s150
      %p152 = scmp.eq.s32.totalorder %s151, 0
      %s154 = sadd.s32 %s153, 1
      %s155 = scalar_select %p152, %s153, %s154
      %p158 = pneg %p152
      %p159 = scmp.eq.s32.totalorder %s17, 3
      %p160 = por %p158, %p159
      %p161 = scmp.ne.s32.totalorder %s153, %s156
      %p162 = scmp.eq.s32.totalorder %s17, 0
      %p163 = por %p161, %p162
      %p164 = scmp.ne.s32.totalorder %s153, %s156
      %p165 = scmp.eq.s32.totalorder %s22, 3
      %p166 = por %p164, %p165
      %p167 = scmp.ne.s32.totalorder %s156, %s157
      %p168 = scmp.eq.s32.totalorder %s22, 0
      %p169 = por %p167, %p168
      %p170 = scmp.ne.s32.totalorder %s156, %s157
      %p171 = scmp.eq.s32.totalorder %s23, 3
      %p172 = por %p170, %p171
      %p174 = scmp.ne.s32.totalorder %s157, %s173
      %p175 = scmp.eq.s32.totalorder %s23, 0
      %p176 = por %p174, %p175
      %p177 = scmp.le.s32.totalorder 1, %s17
      %p178 = scmp.lt.s32.totalorder %s17, 5
      %p179 = pnand %p177, %p178
      %p180 = pneg %p179
      // Predicated region
      $region9: #{tpu_custom_call.1} parent=5 // pred_check
        _
      $region10: #{tpu_custom_call.1} parent=5 // pred_check_branch
        %182 = sbr.rel (%p179) target = $region12
      $region11: #{tpu_custom_call.1} parent=5 // pred_region
        %s183 = ssub.s32 %s17, 1
        // Predicated region
        $region13: #{tpu_custom_call.1} parent=11 // pred_check
          %p184 = pneg %p50
        $region14: #{tpu_custom_call.1} parent=11 // pred_check_branch
          %186 = sbr.rel (%p184) target = $region16
        $region15: #{tpu_custom_call.1} parent=11 // pred_region
          _
        $region16: #{tpu_custom_call.1} parent=11 // pred_fallthru
          _
        // Predicated region
        $region17: #{tpu_custom_call.1} parent=11 // pred_check
          %p187 = pneg %p71
        $region18: #{tpu_custom_call.1} parent=11 // pred_check_branch
          %189 = sbr.rel (%p187) target = $region20
        $region19: #{tpu_custom_call.1} parent=11 // pred_region
          %s191 = ssub.s32 16, 16
          %192 = vsyncadd [#allocation5], %s191
          %s194 = sshll.u32 %s1, 4
          %s195 = int_to_ptr.vmem [resolvable:$true] %s194
          %197 = dma.vmem_to_smem %s195, 16, [#allocation3], [#allocation5]
        $region20: #{tpu_custom_call.1} parent=11 // pred_fallthru
          _
        // Predicated region
        $region21: #{tpu_custom_call.1} parent=11 // pred_check
          %p198 = pneg %p92
        $region22: #{tpu_custom_call.1} parent=11 // pred_check_branch
          %200 = sbr.rel (%p198) target = $region24
        $region23: #{tpu_custom_call.1} parent=11 // pred_region
          %s202 = ssub.s32 16, 16
          %203 = vsyncadd [#allocation7], %s202
          %s205 = sshll.u32 %s2, 4
          %s206 = int_to_ptr.vmem [resolvable:$true] %s205
          %208 = dma.vmem_to_smem %s206, 16, [#allocation6], [#allocation7]
        $region24: #{tpu_custom_call.1} parent=11 // pred_fallthru
          _
        // Predicated region
        $region25: #{tpu_custom_call.1} parent=11 // pred_check
          %p209 = pneg %p113
        $region26: #{tpu_custom_call.1} parent=11 // pred_check_branch
          %211 = sbr.rel (%p209) target = $region28
        $region27: #{tpu_custom_call.1} parent=11 // pred_region
          _
        $region28: #{tpu_custom_call.1} parent=11 // pred_fallthru
          _
      $region12: #{tpu_custom_call.1} parent=5 // pred_fallthru
        _
      %p212 = scmp.lt.s32.totalorder %s17, 4
      // Predicated region
      $region29: #{tpu_custom_call.1} parent=5 // pred_check
        %p213 = pneg %p212
      $region30: #{tpu_custom_call.1} parent=5 // pred_check_branch
        %215 = sbr.rel (%p213) target = $region32
      $region31: #{tpu_custom_call.1} parent=5 // pred_region
        // Predicated region
        $region33: #{tpu_custom_call.1} parent=31 // pred_check
          %p216 = pneg %p135
        $region34: #{tpu_custom_call.1} parent=31 // pred_check_branch
          %218 = sbr.rel (%p216) target = $region36
        $region35: #{tpu_custom_call.1} parent=31 // pred_region
          %p219 = scmp.lt.s32.totalorder %s24, 1
          %s220 = scalar_select %p219, %s24, 1
          %p221 = scmp.lt.s32.totalorder %s25, 1
          %s222 = scalar_select %p221, %s25, 1
          %s223 = smul.addr %s220, 2
          %s224 = sadd.s32 %s222, %s223
          %s225 = smul.addr %s224, 4
          %s226 = scalar_lea.vmem %s4, %s225
        $region36: #{tpu_custom_call.1} parent=31 // pred_fallthru
          _
      $region32: #{tpu_custom_call.1} parent=5 // pred_fallthru
        _
      %p227 = scmp.le.s32.totalorder 1, %s17
      %p228 = scmp.lt.s32.totalorder %s17, 5
      %p229 = pnand %p227, %p228
      %p230 = pneg %p229
      // Predicated region
      $region37: #{tpu_custom_call.1} parent=5 // pred_check
        _
      $region38: #{tpu_custom_call.1} parent=5 // pred_check_branch
        %232 = sbr.rel (%p229) target = $region40
      $region39: #{tpu_custom_call.1} parent=5 // pred_region
        %s233 = ssub.s32 %s17, 1
        // Predicated region
        $region41: #{tpu_custom_call.1} parent=39 // pred_check
          %p234 = pneg %p71
        $region42: #{tpu_custom_call.1} parent=39 // pred_check_branch
          %236 = sbr.rel (%p234) target = $region44
        $region43: #{tpu_custom_call.1} parent=39 // pred_region
          %237 = dma.done [#allocation5], 16
        $region44: #{tpu_custom_call.1} parent=39 // pred_fallthru
          _
        // Predicated region
        $region45: #{tpu_custom_call.1} parent=39 // pred_check
          %p238 = pneg %p92
        $region46: #{tpu_custom_call.1} parent=39 // pred_check_branch
          %240 = sbr.rel (%p238) target = $region48
        $region47: #{tpu_custom_call.1} parent=39 // pred_region
          %241 = dma.done [#allocation7], 16
        $region48: #{tpu_custom_call.1} parent=39 // pred_fallthru
          _
        %242 = sfence
        %p243 = pneg %p50
        %p244 = pneg %p47
        %p245 = pneg %p71
        %p246 = pneg %p68
        %p247 = pneg %p92
        %p248 = pneg %p89
        %p249 = pneg %p113
        %p250 = pneg %p110
        %p251 = scmp.lt.s32.totalorder %s26, 1
        %s252 = scalar_select %p251, %s26, 1
        %p253 = scmp.lt.s32.totalorder %s27, 1
        %s254 = scalar_select %p253, %s27, 1
        %s255 = smul.addr %s252, 2
        %s256 = sadd.s32 %s254, %s255
        %s257 = smul.addr %s256, 4
        %s258 = scalar_lea.vmem %s4, %s257
        %p259 = pneg %p141
        %p260 = pneg %p138
        %p261 = pneg %p169
        %p262 = pneg %p166
        %s263 = sand.u32 %s156, 1
        %s264 = scalar_lea.sflag [#allocation4], %s263
        %s265 = sand.u32 %s156, 1
        %s266 = smul.addr %s265, 4
        %s267 = scalar_lea.vmem [#allocation8], %s266
        %p268 = scmp.lt.s32.totalorder %s26, 1
        %s269 = scalar_select %p268, %s26, 1
        %p270 = scmp.lt.s32.totalorder %s27, 1
        %s271 = scalar_select %p270, %s27, 1
        %s272 = smul.addr %s269, 2
        %s273 = sadd.s32 %s271, %s272
        %s274 = smul.addr %s273, 4
        %s275 = scalar_lea.vmem %s4, %s274
        %v276 = vld [vmem:[%s275] sm:$0xf]
        %v277 = vld [vmem:[%s0] sm:$0xf]
        %279 = vset.pattern.permute.xlu0 0
        %280 = vperm.xlu0 %279, %v277
        %v281 = vpop.permute.xlu0 %280
        %v283 = vmul.f32 %v276, %v281
        %vm284 = vcmask 1043456
        %v285 = vsel %vm284, %v283, 0.0
        %v286 = vrot.slane %v285, 4
        %v287 = vadd.f32 %v285, %v286
        %v288 = vrot.slane %v287, 2
        %v289 = vadd.f32 %v287, %v288
        %v290 = vrot.slane %v289, 1
        %v291 = vadd.f32 %v289, %v290
        %s292 = sld [smem:[#allocation3]]
        %v293 = vstv %s292
        %v294 = vadd.f32 %v291, %v293
        %v295 = vmax.f32 %v294, 0.0
        %s296 = sld [smem:[#allocation6]]
        %v297 = vstv %s296
        %v298 = vmul.f32 %v297, %v295
        %s299 = scalar_lea.vmem %s0, 4
        %v300 = vld [vmem:[%s299] sm:$0xf]
        %302 = vset.pattern.permute.xlu0 0
        %303 = vperm.xlu0 %302, %v300
        %v304 = vpop.permute.xlu0 %303
        %v306 = vmul.f32 %v276, %v304
        %v307 = vsel %vm284, %v306, 0.0
        %v308 = vrot.slane %v307, 4
        %v309 = vadd.f32 %v307, %v308
        %v310 = vrot.slane %v309, 2
        %v311 = vadd.f32 %v309, %v310
        %v312 = vrot.slane %v311, 1
        %v313 = vadd.f32 %v311, %v312
        %s314 = sld [smem:[#allocation3 + $0x1]]
        %v315 = vstv %s314
        %v316 = vadd.f32 %v313, %v315
        %v317 = vmax.f32 %v316, 0.0
        %s318 = sld [smem:[#allocation6 + $0x1]]
        %v319 = vstv %s318
        %v320 = vmul.f32 %v319, %v317
        %v321 = vadd.f32 %v298, %v320
        %s322 = sld [smem:[#allocation2]]
        %v323 = vstv %s322
        %v324 = vadd.f32 %v321, %v323
        %v325 = vxor.u32 %v324, 2147483648
        %v326 = vmul.f32 %v325, 1.442695
        %v327 = vpow.pop %v326
        %v328 = vadd.f32 %v327, 1.0
        %v329 = vrcp.pop %v328
        %v330 = vmul.f32 1.0, %v329
        %v331 = vmul.f32 %v276, %v330
        %332 = vst [vmem:[%s267] sm:$0xf] %v331
        %s333 = sand.u32 %s156, 1
        %s334 = scalar_lea.sflag [#allocation4], %s333
        %s335 = sand.u32 %s156, 1
        %s336 = smul.addr %s335, 4
        %s337 = scalar_lea.vmem [#allocation8], %s336
        // Predicated region
        $region49: #{tpu_custom_call.1} parent=39 // pred_check
          %p338 = pneg %p166
        $region50: #{tpu_custom_call.1} parent=39 // pred_check_branch
          %340 = sbr.rel (%p338) target = $region52
        $region51: #{tpu_custom_call.1} parent=39 // pred_region
          %s342 = ssub.s32 64, 64
          %343 = vsyncadd %s334, %s342
          %s344 = smul.addr %s26, 2
          %s345 = sadd.s32 %s27, %s344
          %s346 = smul.addr %s345, 64
          %s347 = scalar_lea.hbm %s5, %s346
          %s349 = sshll.u32 %s337, 4
          %s350 = int_to_ptr.vmem [resolvable:$true] %s349
          %352 = dma.vmem_to_hbm [thread:$0]  %s350, 64, %s347, %s334
        $region52: #{tpu_custom_call.1} parent=39 // pred_fallthru
          _
      $region40: #{tpu_custom_call.1} parent=5 // pred_fallthru
        _
      %p353 = scmp.le.s32.totalorder 2, %s17
      // Predicated region
      $region53: #{tpu_custom_call.1} parent=5 // pred_check
        %p354 = pneg %p353
      $region54: #{tpu_custom_call.1} parent=5 // pred_check_branch
        %356 = sbr.rel (%p354) target = $region56
      $region55: #{tpu_custom_call.1} parent=5 // pred_region
        %s357 = ssub.s32 %s17, 2
        // Predicated region
        $region57: #{tpu_custom_call.1} parent=55 // pred_check
          %p358 = pneg %p172
        $region58: #{tpu_custom_call.1} parent=55 // pred_check_branch
          %360 = sbr.rel (%p358) target = $region60
        $region59: #{tpu_custom_call.1} parent=55 // pred_region
          %s361 = sand.u32 %s157, 1
          %s362 = scalar_lea.sflag [#allocation4], %s361
          %s363 = sand.u32 %s157, 1
          %s364 = smul.addr %s363, 4
          %s365 = scalar_lea.vmem [#allocation8], %s364
          %366 = dma.done %s362, 64
        $region60: #{tpu_custom_call.1} parent=55 // pred_fallthru
          _
      $region56: #{tpu_custom_call.1} parent=5 // pred_fallthru
        _
    $region6: #{tpu_custom_call.1} parent=1 // loop_footer
      %s21 = sadd.s32 1, %s17
    $region7: #{tpu_custom_call.1} parent=1 // loop_footer_branch
      %16 = sbr.rel target = $region3
    $region8: #{tpu_custom_call.1} parent=1 // loop_exit
      _
    %367 = vsyncpa [#allocation4], 1
    %s368 = scalar_lea.sflag [#allocation4], 1
    %369 = vsyncpa %s368, 1
    %370 = vsyncpa [#allocation5], 1
    %s371 = scalar_lea.sflag [#allocation5], 1
    %372 = vsyncpa %s371, 1
    %373 = vsyncpa [#allocation7], 1

</llo_original>
